<compile_context>
chip_gen: v5e
topology: v5e:2x2
jax: 0.10.0
libtpu: 0.0.40
codegen_flags: <defaults>
</compile_context>

<pallas_src>
import functools

import jax
import jax.numpy as jnp
from jax.experimental import pallas as pl
from jax.experimental.pallas import tpu as pltpu


_LANE = 128
_SUBLANE_BF16 = 16                       # bf16 packs 16 rows per sublane group
_DEFAULT_BATCH_TILE = 1024               # amortizes ~0.35 us per-grid-step overhead
_VMEM_TILE_BUDGET = 24 * 1024 * 1024     # conservative vs v7x ~32 MiB scoped default


def _round_up(n, m):
    return ((n + m - 1) // m) * m


def _dq_forward_kernel(x_ref, w1_ref, b1_ref, w2_ref, b2_ref, out_ref):
    # Layer 1: hidden = relu(x @ W1 + b1); bf16 MXU operands, f32 accumulation.
    x = x_ref[...].astype(w1_ref.dtype)                 # in-kernel f32 -> bf16 cast
    h = jnp.dot(x, w1_ref[...], preferred_element_type=jnp.float32)
    h = jnp.maximum(h + b1_ref[...], 0.0)               # b1 is (1, H) -> broadcasts
    # Layer 2: y = hidden @ W2 + b2.  W2 is lane-padded to 128 for the MXU, but
    # only the real output lanes are stored (output stays unpadded in HBM).
    y = jnp.dot(h.astype(w2_ref.dtype), w2_ref[...],
                preferred_element_type=jnp.float32)
    n_out = out_ref.shape[-1]
    out_ref[...] = (y[:, :n_out] + b2_ref[...]).astype(out_ref.dtype)


def prepare_dq_params(w1, b1, w2, b2):
    """One-time pad + cast of the parameters for the Pallas forward.

    w1: [D_in, H], b1: [H], w2: [H, A], b2: [A]  (weights in [in, out] layout).
    Call once and reuse the result: this keeps per-forward calls free of the
    weight pad/cast HBM passes flagged in the review.
    """
    d_in, h = w1.shape
    h2, a = w2.shape
    assert h2 == h and b1.shape == (h,) and b2.shape == (a,)
    h_pad = _round_up(h, _LANE)
    a_pad = _round_up(a, _LANE)
    bf16, f32 = jnp.bfloat16, jnp.float32
    w1_p = jnp.zeros((d_in, h_pad), bf16).at[:, :h].set(w1.astype(bf16))
    b1_p = jnp.zeros((1, h_pad), f32).at[0, :h].set(b1.astype(f32))
    w2_p = jnp.zeros((h_pad, a_pad), bf16).at[:h, :a].set(w2.astype(bf16))
    b2_p = b2.astype(f32).reshape(1, a)                 # output side stays unpadded
    return w1_p, b1_p, w2_p, b2_p


def _pick_batch_tile(batch_tile, b_aligned, d_in, h_pad, a, a_pad):
    tb = min(_round_up(batch_tile, _SUBLANE_BF16), b_aligned)
    # v7x: keep at least 2 grid steps when the batch allows it so
    # dimension_semantics=("parallel",) shards tiles across both TensorCores.
    if b_aligned >= 2 * _SUBLANE_BF16 and b_aligned <= tb:
        tb = _round_up((b_aligned + 1) // 2, _SUBLANE_BF16)

    # VMEM guard (v7x: 64 MiB physical / ~32 MiB scoped default): shrink TB until
    # double-buffered x/out tiles + replicated weights + the h intermediates fit.
    def vmem_bytes(t):
        x_b = 2 * t * d_in * 4                                   # x tiles, f32, 2 bufs
        out_b = 2 * t * a * 4                                    # out tiles, f32, 2 bufs
        w_b = 2 * (d_in * h_pad + h_pad * a_pad) * 2             # bf16 weights, 2 bufs
        b_b = 2 * (h_pad + a_pad) * 4                            # f32 biases, 2 bufs
        h_b = t * h_pad * (4 + 2)                                # f32 h + bf16 copy
        return x_b + out_b + w_b + b_b + h_b

    while tb > _SUBLANE_BF16 and vmem_bytes(tb) > _VMEM_TILE_BUDGET:
        tb = _round_up(tb // 2, _SUBLANE_BF16)
    return tb


@functools.partial(jax.jit, static_argnames=("batch_tile",))
def dq_classifier_forward(x, w1_p, b1_p, w2_p, b2_p,
                          *, batch_tile=_DEFAULT_BATCH_TILE):
    """Fused MLP forward: relu(x @ w1 + b1) @ w2 + b2 on pre-padded params.

    x: [B, D_in] f32; (w1_p, b1_p, w2_p, b2_p) come from prepare_dq_params.
    Returns [B, A] f32.
    """
    b, d_in = x.shape
    d_in_w, h_pad = w1_p.shape
    h_pad2, a_pad = w2_p.shape
    a = b2_p.shape[1]
    assert d_in_w == d_in and h_pad2 == h_pad

    b_aligned = _round_up(b, _SUBLANE_BF16)
    tb = _pick_batch_tile(batch_tile, b_aligned, d_in, h_pad, a, a_pad)
    b_pad = _round_up(b_aligned, tb)
    grid = (b_pad // tb,)

    # Only the batch axis is padded; K stays at D_in (no 16x x-stream inflation).
    x_p = x if b_pad == b else jnp.pad(x, ((0, b_pad - b), (0, 0)))

    flops = 2 * b_pad * (d_in * h_pad + h_pad * a_pad)
    bytes_accessed = (x_p.size * 4
                      + w1_p.size * 2 + w2_p.size * 2
                      + b1_p.size * 4 + b2_p.size * 4
                      + b_pad * a * 4)

    out_p = pl.pallas_call(
        _dq_forward_kernel,
        out_shape=jax.ShapeDtypeStruct((b_pad, a), jnp.float32),
        grid=grid,
        in_specs=[
            pl.BlockSpec((tb, d_in), lambda i: (i, 0)),       # x: batch-tiled, K unpadded
            pl.BlockSpec((d_in, h_pad), lambda i: (0, 0)),    # w1: grid-invariant
            pl.BlockSpec((1, h_pad), lambda i: (0, 0)),       # b1: grid-invariant
            pl.BlockSpec((h_pad, a_pad), lambda i: (0, 0)),   # w2: lane-padded for MXU
            pl.BlockSpec((1, a), lambda i: (0, 0)),           # b2: unpadded
        ],
        out_specs=pl.BlockSpec((tb, a), lambda i: (i, 0)),    # unpadded output stores
        compiler_params=pltpu.CompilerParams(
            dimension_semantics=("parallel",),                # v7x: shard tiles over TCs
        ),
        cost_estimate=pl.CostEstimate(
            flops=flops, transcendentals=0, bytes_accessed=bytes_accessed),
    )(x_p, w1_p, b1_p, w2_p, b2_p)

    return out_p if b_pad == b else out_p[:b]


def init_dq_params(key, input_dims, n_actions):
    """Deterministic PyTorch-style init (uniform +/- 1/sqrt(fan_in)).

    Returns weights in [in, out] layout (transposed vs torch.nn.Linear storage).
    """
    (d_in,) = input_dims
    hidden = n_actions * 128
    k1, k2, k3, k4 = jax.random.split(key, 4)

    bound1 = 1.0 / (d_in ** 0.5)
    w1 = jax.random.uniform(k1, (d_in, hidden), jnp.float32, -bound1, bound1)
    b1 = jax.random.uniform(k2, (hidden,), jnp.float32, -bound1, bound1)

    bound2 = 1.0 / (hidden ** 0.5)
    w2 = jax.random.uniform(k3, (hidden, n_actions), jnp.float32, -bound2, bound2)
    b2 = jax.random.uniform(k4, (n_actions,), jnp.float32, -bound2, bound2)
    return w1, b1, w2, b2


if __name__ == "__main__":
    # Shapes implied by the module: Linear(*input_dims, n_actions*128) -> Linear(..., n_actions)
    # TODO(synk): Adam optimizer / MSELoss / device placement are training state, not forward.
    input_dims = (8,)     # observation dimension
    n_actions = 4         # hidden = 4 * 128 = 512

    key = jax.random.PRNGKey(0)
    kp, kx_small, kx_big = jax.random.split(key, 3)
    w1, b1, w2, b2 = init_dq_params(kp, input_dims, n_actions)

    # Pad/cast the params ONCE and reuse them across forwards.
    params = prepare_dq_params(w1, b1, w2, b2)

    def ref_forward(x):
        # Pure-JAX f32 reference (kernel uses bf16 MXU inputs with f32 accumulation,
        # so tolerance is loosened accordingly).
        return jnp.maximum(x @ w1 + b1, 0.0) @ w2 + b2

    # Tiny batch (module's typical DQN use) and a multi-tile batch (exercises the
    # >=2-step grid path used for v7x megacore sharding).
    for batch, kx in ((2, kx_small), (64, kx_big)):
        x = jax.random.normal(kx, (batch,) + input_dims, dtype=jnp.float32)
        y = jax.block_until_ready(dq_classifier_forward(x, *params))
        r = ref_forward(x)
        assert y.shape == (batch, n_actions)
        assert jnp.allclose(y, r, atol=2e-2, rtol=2e-2), float(jnp.max(jnp.abs(y - r)))

    print("KERNEL_OK")
</pallas_src>

<mosaic_0001>
module attributes {stable_mosaic.version = 11 : i64} {
  func.func @_dq_forward_kernel(%arg0: i32, %arg1: memref<16x8xf32, #tpu.memory_space<vmem>>, %arg2: memref<8x512xbf16, #tpu.memory_space<vmem>>, %arg3: memref<1x512xf32, #tpu.memory_space<vmem>>, %arg4: memref<512x128xbf16, #tpu.memory_space<vmem>>, %arg5: memref<1x4xf32, #tpu.memory_space<vmem>>, %arg6: memref<16x4xf32, #tpu.memory_space<vmem>>) attributes {dimension_semantics = [#tpu.dimension_semantics<parallel>], iteration_bounds = array<i64: 1>, scalar_prefetch = 0 : i64, scratch_operands = 0 : i64, tpu.core_type = #tpu.core_type<tc>, window_params = [{transform_indices = @transform_0, window_bounds = array<i64: 16, 8>}, {pipeline_mode = #tpu.pipeline_mode<synchronous>, transform_indices = @transform_1, window_bounds = array<i64: 8, 512>}, {pipeline_mode = #tpu.pipeline_mode<synchronous>, transform_indices = @transform_2, window_bounds = array<i64: 1, 512>}, {pipeline_mode = #tpu.pipeline_mode<synchronous>, transform_indices = @transform_3, window_bounds = array<i64: 512, 128>}, {pipeline_mode = #tpu.pipeline_mode<synchronous>, transform_indices = @transform_4, window_bounds = array<i64: 1, 4>}, {transform_indices = @transform_5, window_bounds = array<i64: 16, 4>}]} {
    %c0 = arith.constant 0 : index
    %c0_0 = arith.constant 0 : index
    %0 = vector.load %arg1[%c0, %c0_0] : memref<16x8xf32, #tpu.memory_space<vmem>>, vector<16x8xf32>
    %1 = arith.truncf %0 : vector<16x8xf32> to vector<16x8xbf16>
    %c0_1 = arith.constant 0 : index
    %c0_2 = arith.constant 0 : index
    %2 = vector.load %arg2[%c0_1, %c0_2] : memref<8x512xbf16, #tpu.memory_space<vmem>>, vector<8x512xbf16>
    %cst = arith.constant dense<0.000000e+00> : vector<16x512xf32>
    %3 = tpu.matmul %1, %2, %cst {dimension_numbers = #tpu.dot_dimension_numbers<[1], [0], [0], [1], [0, 0, 1, 1], [], []>} : vector<16x8xbf16>, vector<8x512xbf16>, vector<16x512xf32> -> vector<16x512xf32>
    %c0_3 = arith.constant 0 : index
    %c0_4 = arith.constant 0 : index
    %4 = vector.load %arg3[%c0_3, %c0_4] : memref<1x512xf32, #tpu.memory_space<vmem>>, vector<1x512xf32>
    %5 = vector.broadcast %4 : vector<1x512xf32> to vector<16x512xf32>
    %6 = arith.addf %3, %5 : vector<16x512xf32>
    %cst_5 = arith.constant 0.000000e+00 : f32
    %7 = vector.broadcast %cst_5 : f32 to vector<16x512xf32>
    %8 = arith.maximumf %6, %7 : vector<16x512xf32>
    %9 = arith.truncf %8 : vector<16x512xf32> to vector<16x512xbf16>
    %c0_6 = arith.constant 0 : index
    %c0_7 = arith.constant 0 : index
    %10 = vector.load %arg4[%c0_6, %c0_7] : memref<512x128xbf16, #tpu.memory_space<vmem>>, vector<512x128xbf16>
    %cst_8 = arith.constant dense<0.000000e+00> : vector<16x128xf32>
    %11 = tpu.matmul %9, %10, %cst_8 {dimension_numbers = #tpu.dot_dimension_numbers<[1], [0], [0], [1], [0, 0, 1, 1], [], []>} : vector<16x512xbf16>, vector<512x128xbf16>, vector<16x128xf32> -> vector<16x128xf32>
    %12 = vector.extract_strided_slice %11 {offsets = [0, 0], sizes = [16, 4], strides = [1, 1]} : vector<16x128xf32> to vector<16x4xf32>
    %c0_9 = arith.constant 0 : index
    %c0_10 = arith.constant 0 : index
    %13 = vector.load %arg5[%c0_9, %c0_10] : memref<1x4xf32, #tpu.memory_space<vmem>>, vector<1x4xf32>
    %14 = vector.broadcast %13 : vector<1x4xf32> to vector<16x4xf32>
    %15 = arith.addf %12, %14 : vector<16x4xf32>
    %c0_11 = arith.constant 0 : index
    %c0_12 = arith.constant 0 : index
    %16 = vector.load %arg6[%c0_11, %c0_12] : memref<16x4xf32, #tpu.memory_space<vmem>>, vector<16x4xf32>
    tpu.vector_store %arg6[%c0_11, %c0_12], %15 {strides = array<i32>} : memref<16x4xf32, #tpu.memory_space<vmem>>, vector<16x4xf32>,
    return
  }
  func.func @transform_0(%arg0: i32) -> (i32, i32) {
    %c0_i32 = arith.constant 0 : i32
    %c0_i32_0 = arith.constant 0 : i32
    return %arg0, %c0_i32 : i32, i32
  }
  func.func @transform_1(%arg0: i32) -> (i32, i32) {
    %c0_i32 = arith.constant 0 : i32
    %c0_i32_0 = arith.constant 0 : i32
    %c0_i32_1 = arith.constant 0 : i32
    return %c0_i32, %c0_i32_0 : i32, i32
  }
  func.func @transform_2(%arg0: i32) -> (i32, i32) {
    %c0_i32 = arith.constant 0 : i32
    %c0_i32_0 = arith.constant 0 : i32
    %c0_i32_1 = arith.constant 0 : i32
    return %c0_i32, %c0_i32_0 : i32, i32
  }
  func.func @transform_3(%arg0: i32) -> (i32, i32) {
    %c0_i32 = arith.constant 0 : i32
    %c0_i32_0 = arith.constant 0 : i32
    %c0_i32_1 = arith.constant 0 : i32
    return %c0_i32, %c0_i32_0 : i32, i32
  }
  func.func @transform_4(%arg0: i32) -> (i32, i32) {
    %c0_i32 = arith.constant 0 : i32
    %c0_i32_0 = arith.constant 0 : i32
    %c0_i32_1 = arith.constant 0 : i32
    return %c0_i32, %c0_i32_0 : i32, i32
  }
  func.func @transform_5(%arg0: i32) -> (i32, i32) {
    %c0_i32 = arith.constant 0 : i32
    %c0_i32_0 = arith.constant 0 : i32
    return %arg0, %c0_i32 : i32, i32
  }
}

</mosaic_0001>

<llo_original>
// kernel: dq_classifier_forward.1
$region0: #{dq_classifier_forward.1}
  #allocation0 [shape = 'u32[]', space=smem, size = 0x4, offset = 0x4, fixed_abs, tag = 'smem constant byte address 0x4 - core index']
  #allocation1 [shape = 'u32[72,128]{1,0:T(1,128)}', space=vmem, size = 0x9000, scoped, tag = 'internal scratch']
  %s0 = inlined_call_operand.vmem [shape: f32[16,8], index: 0, kind: input, shape index: {}]
  %s1 = inlined_call_operand.vmem [shape: bf16[8,512], index: 1, kind: input, shape index: {}]
  %s2 = inlined_call_operand.vmem [shape: f32[1,512], index: 2, kind: input, shape index: {}]
  %s3 = inlined_call_operand.hbm [shape: bf16[512,128], index: 3, kind: input, shape index: {}]
  %s4 = inlined_call_operand.vmem [shape: f32[1,4], index: 4, kind: input, shape index: {}]
  %s5 = inlined_call_operand.vmem [shape: f32[16,4], index: 5, kind: output, shape index: {}]
  %s6 = sld [smem:[#allocation0]]
  $region34: #{dq_classifier_forward.1} parent=0
    _
  %s8 = ssub.s32 1, %s6
  %s9 = scalar_select 0, %s8, %s6
  $region1: #{dq_classifier_forward.1} parent=0
    #allocation2 [shape = 'u8[131072]{0}', space=vmem, size = 0x20000, scoped, tag = 'input window, operand 3, single buffered']
    #allocation3 [shape = 's32[1]{0}', space=sflag, size = 0x4, scoped, tag = 'scoped memory for dq_classifier_forward.1']
    %10 = vsyncpa [#allocation3], 0
    // Predicated region
    $region2: #{dq_classifier_forward.1} parent=1 // pred_check
      _
    $region3: #{dq_classifier_forward.1} parent=1 // pred_check_branch
      %12 = sbr.rel (0) target = $region5
    $region4: #{dq_classifier_forward.1} parent=1 // pred_region
      _
    $region5: #{dq_classifier_forward.1} parent=1 // pred_fallthru
      _
    // Predicated region
    $region6: #{dq_classifier_forward.1} parent=1 // pred_check
      _
    $region7: #{dq_classifier_forward.1} parent=1 // pred_check_branch
      %14 = sbr.rel (0) target = $region9
    $region8: #{dq_classifier_forward.1} parent=1 // pred_region
      _
    $region9: #{dq_classifier_forward.1} parent=1 // pred_fallthru
      _
    // Predicated region
    $region10: #{dq_classifier_forward.1} parent=1 // pred_check
      _
    $region11: #{dq_classifier_forward.1} parent=1 // pred_check_branch
      %16 = sbr.rel (0) target = $region13
    $region12: #{dq_classifier_forward.1} parent=1 // pred_region
      _
    $region13: #{dq_classifier_forward.1} parent=1 // pred_fallthru
      _
    // Predicated region
    $region14: #{dq_classifier_forward.1} parent=1 // pred_check
      _
    $region15: #{dq_classifier_forward.1} parent=1 // pred_check_branch
      %18 = sbr.rel (0) target = $region17
    $region16: #{dq_classifier_forward.1} parent=1 // pred_region
      %20 = vsyncadd [#allocation3], 0
      %s21 = sshll.u32 %s3, 4
      %s22 = int_to_ptr.hbm [resolvable:$true] %s21
      %s23 = sshll.u32 [#allocation2], 4
      %s24 = int_to_ptr.vmem [resolvable:$true] %s23
      %29 = dma.hbm_to_vmem [thread:$0]  %s22, 4096, %s24, [#allocation3], 64, 64, 4
    $region17: #{dq_classifier_forward.1} parent=1 // pred_fallthru
      _
    // Predicated region
    $region18: #{dq_classifier_forward.1} parent=1 // pred_check
      _
    $region19: #{dq_classifier_forward.1} parent=1 // pred_check_branch
      %31 = sbr.rel (0) target = $region21
    $region20: #{dq_classifier_forward.1} parent=1 // pred_region
      _
    $region21: #{dq_classifier_forward.1} parent=1 // pred_fallthru
      _
    // Predicated region
    $region22: #{dq_classifier_forward.1} parent=1 // pred_check
      _
    $region23: #{dq_classifier_forward.1} parent=1 // pred_check_branch
      %33 = sbr.rel (0) target = $region25
    $region24: #{dq_classifier_forward.1} parent=1 // pred_region
      %35 = dma.done [#allocation3], 4096
    $region25: #{dq_classifier_forward.1} parent=1 // pred_fallthru
      _
    %v37 = vld [vmem:[%s0] sm:$0xff]
    %v38 = vld [vmem:[%s0 + $0x8] sm:$0xff]
    %v39 = vpack.c.bf16 %v38, %v37
    %v40 = vld [vmem:[%s1] sm:$0xff]
    %v41 = vld [vmem:[%s1 + $0x8] sm:$0xff]
    %v42 = vld [vmem:[%s2] sm:$0xf]
    %v44 = vperm.slane %v42, 0
    %v45 = vperm.slane %v42, 1
    %v46 = vperm.slane %v42, 2
    %v47 = vperm.slane %v42, 3
    %v54 = vunpack.c.l.b16 %v40
    %v55 = vunpack.c.h.b16 %v40
    %v56 = vunpack.c.l.b16 %v41
    %v57 = vunpack.c.h.b16 %v41
    %v58 = vpack.c.b16 %v54, %v54
    %v59 = vpack.c.b16 %v55, %v55
    %v60 = vpack.c.b16 %v56, %v56
    %v61 = vpack.c.b16 %v57, %v57
    %vm62 = vcmask 64512
    %v64 = vsel %vm62, %v39, 0
    %vm66 = vcmask 1043456
    %v68 = vsel %vm66, %v58, 0
    %v71 = vsel %vm66, %v59, 0
    %v74 = vsel %vm66, %v60, 0
    %v77 = vsel %vm66, %v61, 0
    %79 = vmatpush.bf16.msra.mxu0 0
    %80 = vmatpush.bf16.msra.mxu0 0
    %81 = vmatpush.bf16.msra.mxu0 0
    %82 = vmatpush.bf16.msra.mxu0 0
    %83 = vmatpush.bf16.msra.mxu0 0
    %84 = vmatpush.bf16.msra.mxu0 0
    %85 = vmatpush.bf16.msra.mxu0 0
    %86 = vmatpush.bf16.msra.mxu0 %v68
    %87 = vmatmul.bf16.gmra.mxu0 %v64
    %v88 = vpop.f32.mrf.mxu0
    %v89 = vadd.f32 %v44, %v88
    %v90 = vpop.f32.mrf.mxu0
    %v91 = vadd.f32 %v44, %v90
    %92 = vdwg.mxu0
    %93 = vmatpush.bf16.msra.mxu0 0
    %94 = vmatpush.bf16.msra.mxu0 0
    %95 = vmatpush.bf16.msra.mxu0 0
    %96 = vmatpush.bf16.msra.mxu0 0
    %97 = vmatpush.bf16.msra.mxu0 0
    %98 = vmatpush.bf16.msra.mxu0 0
    %99 = vmatpush.bf16.msra.mxu0 0
    %100 = vmatpush.bf16.msra.mxu0 %v71
    %101 = vmatmul.bf16.gmra.mxu0 %v64
    %v102 = vpop.f32.mrf.mxu0
    %v103 = vadd.f32 %v45, %v102
    %v104 = vpop.f32.mrf.mxu0
    %v105 = vadd.f32 %v45, %v104
    %106 = vdwg.mxu0
    %107 = vmatpush.bf16.msra.mxu0 0
    %108 = vmatpush.bf16.msra.mxu0 0
    %109 = vmatpush.bf16.msra.mxu0 0
    %110 = vmatpush.bf16.msra.mxu0 0
    %111 = vmatpush.bf16.msra.mxu0 0
    %112 = vmatpush.bf16.msra.mxu0 0
    %113 = vmatpush.bf16.msra.mxu0 0
    %114 = vmatpush.bf16.msra.mxu0 %v74
    %115 = vmatmul.bf16.gmra.mxu0 %v64
    %v116 = vpop.f32.mrf.mxu0
    %v117 = vadd.f32 %v46, %v116
    %v118 = vpop.f32.mrf.mxu0
    %v119 = vadd.f32 %v46, %v118
    %120 = vdwg.mxu0
    %121 = vmatpush.bf16.msra.mxu0 0
    %122 = vmatpush.bf16.msra.mxu0 0
    %123 = vmatpush.bf16.msra.mxu0 0
    %124 = vmatpush.bf16.msra.mxu0 0
    %125 = vmatpush.bf16.msra.mxu0 0
    %126 = vmatpush.bf16.msra.mxu0 0
    %127 = vmatpush.bf16.msra.mxu0 0
    %128 = vmatpush.bf16.msra.mxu0 %v77
    %129 = vmatmul.bf16.gmra.mxu0 %v64
    %v130 = vpop.f32.mrf.mxu0
    %v131 = vadd.f32 %v47, %v130
    %v132 = vpop.f32.mrf.mxu0
    %v133 = vadd.f32 %v47, %v132
    %134 = vdwg.mxu0
    %v135 = vmax.f32 %v89, 0.0
    %v136 = vmax.f32 %v103, 0.0
    %v137 = vmax.f32 %v117, 0.0
    %v138 = vmax.f32 %v131, 0.0
    %v139 = vmax.f32 %v91, 0.0
    %v140 = vmax.f32 %v105, 0.0
    %v141 = vmax.f32 %v119, 0.0
    %v142 = vmax.f32 %v133, 0.0
    %v143 = vpack.c.bf16 %v139, %v135
    %v144 = vpack.c.bf16 %v140, %v136
    %v145 = vpack.c.bf16 %v141, %v137
    %v146 = vpack.c.bf16 %v142, %v138
    %v147 = vld [vmem:[#allocation2] sm:$0xf]
    %v148 = vld [vmem:[#allocation2 + $0x4] sm:$0xf]
    %v149 = vld [vmem:[#allocation2 + $0x8] sm:$0xf]
    %v150 = vld [vmem:[#allocation2 + $0xc] sm:$0xf]
    %v151 = vld [vmem:[#allocation2 + $0x10] sm:$0xf]
    %v152 = vld [vmem:[#allocation2 + $0x14] sm:$0xf]
    %v153 = vld [vmem:[#allocation2 + $0x18] sm:$0xf]
    %v154 = vld [vmem:[#allocation2 + $0x1c] sm:$0xf]
    %v155 = vld [vmem:[#allocation2 + $0x20] sm:$0xf]
    %v156 = vld [vmem:[#allocation2 + $0x24] sm:$0xf]
    %v157 = vld [vmem:[#allocation2 + $0x28] sm:$0xf]
    %v158 = vld [vmem:[#allocation2 + $0x2c] sm:$0xf]
    %v159 = vld [vmem:[#allocation2 + $0x30] sm:$0xf]
    %v160 = vld [vmem:[#allocation2 + $0x34] sm:$0xf]
    %v161 = vld [vmem:[#allocation2 + $0x38] sm:$0xf]
    %v162 = vld [vmem:[#allocation2 + $0x3c] sm:$0xf]
    %v163 = vld [vmem:[#allocation2 + $0x40] sm:$0xf]
    %v164 = vld [vmem:[#allocation2 + $0x44] sm:$0xf]
    %v165 = vld [vmem:[#allocation2 + $0x48] sm:$0xf]
    %v166 = vld [vmem:[#allocation2 + $0x4c] sm:$0xf]
    %v167 = vld [vmem:[#allocation2 + $0x50] sm:$0xf]
    %v168 = vld [vmem:[#allocation2 + $0x54] sm:$0xf]
    %v169 = vld [vmem:[#allocation2 + $0x58] sm:$0xf]
    %v170 = vld [vmem:[#allocation2 + $0x5c] sm:$0xf]
    %v171 = vld [vmem:[#allocation2 + $0x60] sm:$0xf]
    %v172 = vld [vmem:[#allocation2 + $0x64] sm:$0xf]
    %v173 = vld [vmem:[#allocation2 + $0x68] sm:$0xf]
    %v174 = vld [vmem:[#allocation2 + $0x6c] sm:$0xf]
    %v175 = vld [vmem:[#allocation2 + $0x70] sm:$0xf]
    %v176 = vld [vmem:[#allocation2 + $0x74] sm:$0xf]
    %v177 = vld [vmem:[#allocation2 + $0x78] sm:$0xf]
    %v178 = vld [vmem:[#allocation2 + $0x7c] sm:$0xf]
    %v179 = vld [vmem:[#allocation2 + $0x80] sm:$0xf]
    %v180 = vld [vmem:[#allocation2 + $0x84] sm:$0xf]
    %v181 = vld [vmem:[#allocation2 + $0x88] sm:$0xf]
    %v182 = vld [vmem:[#allocation2 + $0x8c] sm:$0xf]
    %v183 = vld [vmem:[#allocation2 + $0x90] sm:$0xf]
    %v184 = vld [vmem:[#allocation2 + $0x94] sm:$0xf]
    %v185 = vld [vmem:[#allocation2 + $0x98] sm:$0xf]
    %v186 = vld [vmem:[#allocation2 + $0x9c] sm:$0xf]
    %v187 = vld [vmem:[#allocation2 + $0xa0] sm:$0xf]
    %v188 = vld [vmem:[#allocation2 + $0xa4] sm:$0xf]
    %v189 = vld [vmem:[#allocation2 + $0xa8] sm:$0xf]
    %v190 = vld [vmem:[#allocation2 + $0xac] sm:$0xf]
    %v191 = vld [vmem:[#allocation2 + $0xb0] sm:$0xf]
    %v192 = vld [vmem:[#allocation2 + $0xb4] sm:$0xf]
    %v193 = vld [vmem:[#allocation2 + $0xb8] sm:$0xf]
    %v194 = vld [vmem:[#allocation2 + $0xbc] sm:$0xf]
    %v195 = vld [vmem:[#allocation2 + $0xc0] sm:$0xf]
    %v196 = vld [vmem:[#allocation2 + $0xc4] sm:$0xf]
    %v197 = vld [vmem:[#allocation2 + $0xc8] sm:$0xf]
    %v198 = vld [vmem:[#allocation2 + $0xcc] sm:$0xf]
    %v199 = vld [vmem:[#allocation2 + $0xd0] sm:$0xf]
    %v200 = vld [vmem:[#allocation2 + $0xd4] sm:$0xf]
    %v201 = vld [vmem:[#allocation2 + $0xd8] sm:$0xf]
    %v202 = vld [vmem:[#allocation2 + $0xdc] sm:$0xf]
    %v203 = vld [vmem:[#allocation2 + $0xe0] sm:$0xf]
    %v204 = vld [vmem:[#allocation2 + $0xe4] sm:$0xf]
    %v205 = vld [vmem:[#allocation2 + $0xe8] sm:$0xf]
    %v206 = vld [vmem:[#allocation2 + $0xec] sm:$0xf]
    %v207 = vld [vmem:[#allocation2 + $0xf0] sm:$0xf]
    %v208 = vld [vmem:[#allocation2 + $0xf4] sm:$0xf]
    %v209 = vld [vmem:[#allocation2 + $0xf8] sm:$0xf]
    %v210 = vld [vmem:[#allocation2 + $0xfc] sm:$0xf]
    %v275 = vunpack.c.l.b16 %v147
    %v276 = vunpack.c.l.b16 %v148
    %v277 = vunpack.c.l.b16 %v149
    %v278 = vunpack.c.l.b16 %v150
    %v279 = vunpack.c.l.b16 %v151
    %v280 = vunpack.c.l.b16 %v152
    %v281 = vunpack.c.l.b16 %v153
    %v282 = vunpack.c.l.b16 %v154
    %v283 = vunpack.c.l.b16 %v155
    %v284 = vunpack.c.l.b16 %v156
    %v285 = vunpack.c.l.b16 %v157
    %v286 = vunpack.c.l.b16 %v158
    %v287 = vunpack.c.l.b16 %v159
    %v288 = vunpack.c.l.b16 %v160
    %v289 = vunpack.c.l.b16 %v161
    %v290 = vunpack.c.l.b16 %v162
    %v291 = vunpack.c.l.b16 %v163
    %v292 = vunpack.c.l.b16 %v164
    %v293 = vunpack.c.l.b16 %v165
    %v294 = vunpack.c.l.b16 %v166
    %v295 = vunpack.c.l.b16 %v167
    %v296 = vunpack.c.l.b16 %v168
    %v297 = vunpack.c.l.b16 %v169
    %v298 = vunpack.c.l.b16 %v170
    %v299 = vunpack.c.l.b16 %v171
    %v300 = vunpack.c.l.b16 %v172
    %v301 = vunpack.c.l.b16 %v173
    %v302 = vunpack.c.l.b16 %v174
    %v303 = vunpack.c.l.b16 %v175
    %v304 = vunpack.c.l.b16 %v176
    %v305 = vunpack.c.l.b16 %v177
    %v306 = vunpack.c.l.b16 %v178
    %v307 = vunpack.c.l.b16 %v179
    %v308 = vunpack.c.l.b16 %v180
    %v309 = vunpack.c.l.b16 %v181
    %v310 = vunpack.c.l.b16 %v182
    %v311 = vunpack.c.l.b16 %v183
    %v312 = vunpack.c.l.b16 %v184
    %v313 = vunpack.c.l.b16 %v185
    %v314 = vunpack.c.l.b16 %v186
    %v315 = vunpack.c.l.b16 %v187
    %v316 = vunpack.c.l.b16 %v188
    %v317 = vunpack.c.l.b16 %v189
    %v318 = vunpack.c.l.b16 %v190
    %v319 = vunpack.c.l.b16 %v191
    %v320 = vunpack.c.l.b16 %v192
    %v321 = vunpack.c.l.b16 %v193
    %v322 = vunpack.c.l.b16 %v194
    %v323 = vunpack.c.l.b16 %v195
    %v324 = vunpack.c.l.b16 %v196
    %v325 = vunpack.c.l.b16 %v197
    %v326 = vunpack.c.l.b16 %v198
    %v327 = vunpack.c.l.b16 %v199
    %v328 = vunpack.c.l.b16 %v200
    %v329 = vunpack.c.l.b16 %v201
    %v330 = vunpack.c.l.b16 %v202
    %v331 = vunpack.c.l.b16 %v203
    %v332 = vunpack.c.l.b16 %v204
    %v333 = vunpack.c.l.b16 %v205
    %v334 = vunpack.c.l.b16 %v206
    %v335 = vunpack.c.l.b16 %v207
    %v336 = vunpack.c.l.b16 %v208
    %v337 = vunpack.c.l.b16 %v209
    %v338 = vunpack.c.l.b16 %v210
    %v339 = vpack.c.b16 %v276, %v275
    %v340 = vpack.c.b16 %v278, %v277
    %v341 = vpack.c.b16 %v280, %v279
    %v342 = vpack.c.b16 %v282, %v281
    %v343 = vpack.c.b16 %v284, %v283
    %v344 = vpack.c.b16 %v286, %v285
    %v345 = vpack.c.b16 %v288, %v287
    %v346 = vpack.c.b16 %v290, %v289
    %v347 = vpack.c.b16 %v292, %v291
    %v348 = vpack.c.b16 %v294, %v293
    %v349 = vpack.c.b16 %v296, %v295
    %v350 = vpack.c.b16 %v298, %v297
    %v351 = vpack.c.b16 %v300, %v299
    %v352 = vpack.c.b16 %v302, %v301
    %v353 = vpack.c.b16 %v304, %v303
    %v354 = vpack.c.b16 %v306, %v305
    %v355 = vpack.c.b16 %v308, %v307
    %v356 = vpack.c.b16 %v310, %v309
    %v357 = vpack.c.b16 %v312, %v311
    %v358 = vpack.c.b16 %v314, %v313
    %v359 = vpack.c.b16 %v316, %v315
    %v360 = vpack.c.b16 %v318, %v317
    %v361 = vpack.c.b16 %v320, %v319
    %v362 = vpack.c.b16 %v322, %v321
    %v363 = vpack.c.b16 %v324, %v323
    %v364 = vpack.c.b16 %v326, %v325
    %v365 = vpack.c.b16 %v328, %v327
    %v366 = vpack.c.b16 %v330, %v329
    %v367 = vpack.c.b16 %v332, %v331
    %v368 = vpack.c.b16 %v334, %v333
    %v369 = vpack.c.b16 %v336, %v335
    %v370 = vpack.c.b16 %v338, %v337
    %403 = vmatpush.bf16.msra.mxu0 %v346
    %404 = vmatpush.bf16.msra.mxu0 %v345
    %405 = vmatpush.bf16.msra.mxu0 %v344
    %406 = vmatpush.bf16.msra.mxu0 %v343
    %407 = vmatpush.bf16.msra.mxu0 %v342
    %408 = vmatpush.bf16.msra.mxu0 %v341
    %409 = vmatpush.bf16.msra.mxu0 %v340
    %410 = vmatpush.bf16.msra.mxu0 %v339
    %411 = vmatmul.bf16.gmra.mxu0 %v143
    %v412 = vpop.f32.mrf.mxu0
    %v413 = vadd.f32 0.0, %v412
    %v414 = vpop.f32.mrf.mxu0
    %v415 = vadd.f32 0.0, %v414
    %416 = vdwg.mxu0
    %417 = vmatpush.bf16.msra.mxu0 %v354
    %418 = vmatpush.bf16.msra.mxu0 %v353
    %419 = vmatpush.bf16.msra.mxu0 %v352
    %420 = vmatpush.bf16.msra.mxu0 %v351
    %421 = vmatpush.bf16.msra.mxu0 %v350
    %422 = vmatpush.bf16.msra.mxu0 %v349
    %423 = vmatpush.bf16.msra.mxu0 %v348
    %424 = vmatpush.bf16.msra.mxu0 %v347
    %425 = vmatmul.bf16.gmra.mxu0 %v144
    %v426 = vpop.f32.mrf.mxu0
    %v427 = vadd.f32 %v413, %v426
    %v428 = vpop.f32.mrf.mxu0
    %v429 = vadd.f32 %v415, %v428
    %430 = vdwg.mxu0
    %431 = vmatpush.bf16.msra.mxu0 %v362
    %432 = vmatpush.bf16.msra.mxu0 %v361
    %433 = vmatpush.bf16.msra.mxu0 %v360
    %434 = vmatpush.bf16.msra.mxu0 %v359
    %435 = vmatpush.bf16.msra.mxu0 %v358
    %436 = vmatpush.bf16.msra.mxu0 %v357
    %437 = vmatpush.bf16.msra.mxu0 %v356
    %438 = vmatpush.bf16.msra.mxu0 %v355
    %439 = vmatmul.bf16.gmra.mxu0 %v145
    %v440 = vpop.f32.mrf.mxu0
    %v441 = vadd.f32 %v427, %v440
    %v442 = vpop.f32.mrf.mxu0
    %v443 = vadd.f32 %v429, %v442
    %444 = vdwg.mxu0
    %445 = vmatpush.bf16.msra.mxu0 %v370
    %446 = vmatpush.bf16.msra.mxu0 %v369
    %447 = vmatpush.bf16.msra.mxu0 %v368
    %448 = vmatpush.bf16.msra.mxu0 %v367
    %449 = vmatpush.bf16.msra.mxu0 %v366
    %450 = vmatpush.bf16.msra.mxu0 %v365
    %451 = vmatpush.bf16.msra.mxu0 %v364
    %452 = vmatpush.bf16.msra.mxu0 %v363
    %453 = vmatmul.bf16.gmra.mxu0 %v146
    %v454 = vpop.f32.mrf.mxu0
    %v455 = vadd.f32 %v441, %v454
    %v456 = vpop.f32.mrf.mxu0
    %v457 = vadd.f32 %v443, %v456
    %458 = vdwg.mxu0
    %v459 = vld [vmem:[%s4] sm:$0x1]
    %v461 = vperm.slane %v459, 0
    %v463 = vadd.f32 %v455, %v461
    %v464 = vadd.f32 %v457, %v461
    %vm465 = vcmask 31744
    %466 = vst.msk [vmem:[%s5] sm:$0xff] %vm465, %v463
    %467 = vst.msk [vmem:[%s5 + $0x8] sm:$0xff] %vm465, %v464
    // Predicated region
    $region26: #{dq_classifier_forward.1} parent=1 // pred_check
      _
    $region27: #{dq_classifier_forward.1} parent=1 // pred_check_branch
      %469 = sbr.rel (0) target = $region29
    $region28: #{dq_classifier_forward.1} parent=1 // pred_region
      _
    $region29: #{dq_classifier_forward.1} parent=1 // pred_fallthru
      _
    // Predicated region
    $region30: #{dq_classifier_forward.1} parent=1 // pred_check
      _
    $region31: #{dq_classifier_forward.1} parent=1 // pred_check_branch
      %471 = sbr.rel (0) target = $region33
    $region32: #{dq_classifier_forward.1} parent=1 // pred_region
      _
    $region33: #{dq_classifier_forward.1} parent=1 // pred_fallthru
      _
    %472 = vsyncpa [#allocation3], 1

</llo_original>
